<compile_context>
chip_gen: v7x
topology: tpu7x:2x2x1
jax: 0.10.0
libtpu: 0.0.40
codegen_flags: <defaults>
</compile_context>

<pallas_src>
import functools

import jax
import jax.numpy as jnp
from jax.experimental import pallas as pl
from jax.experimental.pallas import tpu as pltpu


def _leaky_relu(x, slope=0.2):
    # max(x, slope*x) == LeakyReLU(slope) for slope in (0, 1)
    return jnp.maximum(x, slope * x)


def _disc_ecal_kernel(x_ref,
                      w1_ref, b1_ref,
                      w2_ref, b2_ref,
                      w3_ref, b3_ref,
                      w4_ref, b4_ref,
                      out_ref,
                      *, apply_sigmoid):
    """Fused MLP: 3x (Linear + LeakyReLU(0.2)) + Linear(., 1) [+ sigmoid]."""
    # x and all weights arrive as bf16; every dot accumulates in f32 on the MXU.
    h = jnp.dot(x_ref[...], w1_ref[...], preferred_element_type=jnp.float32)
    h = _leaky_relu(h + b1_ref[...])

    h = jnp.dot(h.astype(jnp.bfloat16), w2_ref[...],
                preferred_element_type=jnp.float32)
    h = _leaky_relu(h + b2_ref[...])

    h = jnp.dot(h.astype(jnp.bfloat16), w3_ref[...],
                preferred_element_type=jnp.float32)
    h = _leaky_relu(h + b3_ref[...])

    h = jnp.dot(h.astype(jnp.bfloat16), w4_ref[...],
                preferred_element_type=jnp.float32)
    h = h + b4_ref[...]

    if apply_sigmoid:                       # static (trace-time) flag
        h = 1.0 / (1.0 + jnp.exp(-h))

    out_ref[...] = h.astype(out_ref.dtype)


def disc_ecal_forward(x, params, *, apply_sigmoid=True, block_m=128):
    """Runs the fused Pallas kernel. Returns (B, 1) like the torch module."""
    B = x.shape[0]
    # x.view(B, -1); cast to bf16 once on the host side.
    x2d = jnp.reshape(x, (B, -1)).astype(jnp.bfloat16)
    size = x2d.shape[1]

    (w1, b1), (w2, b2), (w3, b3), (w4, b4) = params
    assert w1.shape[0] == size and w4.shape[1] == 1

    # Cast weights to bf16 once outside the kernel (accumulation stays f32).
    w1b, w2b, w3b, w4b = (w.astype(jnp.bfloat16) for w in (w1, w2, w3, w4))

    # Pad the batch up to a multiple of the batch tile.
    n_tiles = pl.cdiv(B, block_m)
    Bp = n_tiles * block_m
    if Bp != B:
        x2d = jnp.pad(x2d, ((0, Bp - B), (0, 0)))

    flops = 2 * Bp * (size * w1.shape[1]
                      + w1.shape[1] * w2.shape[1]
                      + w2.shape[1] * w3.shape[1]
                      + w3.shape[1] * w4.shape[1])
    bytes_accessed = (x2d.size * 2
                      + sum(int(w.size) * 2 for w in (w1, w2, w3, w4))
                      + sum(int(b.size) * 4 for b in (b1, b2, b3, b4))
                      + Bp * 4)
    cost = pl.CostEstimate(flops=int(flops),
                           transcendentals=int(Bp if apply_sigmoid else 0),
                           bytes_accessed=int(bytes_accessed))

    const = lambda i: (0, 0)                 # weights resident across grid steps

    out = pl.pallas_call(
        functools.partial(_disc_ecal_kernel, apply_sigmoid=apply_sigmoid),
        out_shape=jax.ShapeDtypeStruct((Bp, 1), jnp.float32),
        grid_spec=pltpu.PrefetchScalarGridSpec(
            num_scalar_prefetch=0,
            grid=(n_tiles,),
            in_specs=[
                pl.BlockSpec((block_m, size), lambda i: (i, 0)),
                pl.BlockSpec(w1.shape, const), pl.BlockSpec(b1.shape, const),
                pl.BlockSpec(w2.shape, const), pl.BlockSpec(b2.shape, const),
                pl.BlockSpec(w3.shape, const), pl.BlockSpec(b3.shape, const),
                pl.BlockSpec(w4.shape, const), pl.BlockSpec(b4.shape, const),
            ],
            out_specs=pl.BlockSpec((block_m, 1), lambda i: (i, 0)),
        ),
        compiler_params=pltpu.CompilerParams(
            dimension_semantics=("parallel",)),   # shards batch tiles on v7x's 2 TCs
        cost_estimate=cost,
    )(x2d, w1b, b1, w2b, b2, w3b, b3, w4b, b4)

    return out[:B]


def init_params(key, nz, nf_extra, nc, img_size):
    """Deterministic PyTorch-style (uniform +-1/sqrt(fan_in)) init, f32."""
    nf = nz + nf_extra
    nfx2 = nf * 2
    nfx4 = nf * 4
    size = nc * img_size * img_size

    dims = [(size, nfx4), (nfx4, nfx2), (nfx2, nf), (nf, 1)]
    params = []
    for (fan_in, fan_out) in dims:
        key, kw, kb = jax.random.split(key, 3)
        bound = 1.0 / (fan_in ** 0.5)
        w = jax.random.uniform(kw, (fan_in, fan_out), jnp.float32, -bound, bound)
        # biases kept 2-D (1, fan_out) so they broadcast cleanly on TPU tiles
        b = jax.random.uniform(kb, (1, fan_out), jnp.float32, -bound, bound)
        params.append((w, b))
    return params


def reference_forward(x, params, *, apply_sigmoid=True):
    """Plain-JAX f32 reference for a sanity check."""
    B = x.shape[0]
    h = jnp.reshape(x, (B, -1))
    (w1, b1), (w2, b2), (w3, b3), (w4, b4) = params
    h = jax.nn.leaky_relu(h @ w1 + b1, 0.2)
    h = jax.nn.leaky_relu(h @ w2 + b2, 0.2)
    h = jax.nn.leaky_relu(h @ w3 + b3, 0.2)
    h = h @ w4 + b4
    if apply_sigmoid:
        h = jax.nn.sigmoid(h)
    return h


if __name__ == "__main__":
    # problem.nz = 8, problem.nf = 24 -> nf = 32, nfx2 = 64, nfx4 = 128
    # problem.nc = 1, problem.imgSize = 16 -> size = 256
    nz, nf_extra, nc, img_size = 8, 24, 1, 16
    batch = 256                      # 2 batch tiles of 128 -> exercises the grid

    key = jax.random.PRNGKey(0)
    key, kx = jax.random.split(key)
    params = init_params(key, nz, nf_extra, nc, img_size)
    x = jax.random.normal(kx, (batch, nc, img_size, img_size), jnp.float32)

    # type == mygan.GANS.GAN -> sigmoid applied (exposed as a static flag).
    out = disc_ecal_forward(x, params, apply_sigmoid=True)
    out = jax.block_until_ready(out)

    ref = reference_forward(x, params, apply_sigmoid=True)
    assert out.shape == (batch, 1)
    # bf16 matmul inputs (f32 accumulation) -> relaxed tolerance vs f32 reference
    assert jnp.allclose(out, ref, atol=2e-2, rtol=2e-2)

    print("KERNEL_OK")
</pallas_src>

<mosaic_0001>
module attributes {stable_mosaic.version = 11 : i64} {
  func.func @_disc_ecal_kernel(%arg0: i32, %arg1: memref<128x256xbf16, #tpu.memory_space<vmem>>, %arg2: memref<256x128xbf16, #tpu.memory_space<vmem>>, %arg3: memref<1x128xf32, #tpu.memory_space<vmem>>, %arg4: memref<128x64xbf16, #tpu.memory_space<vmem>>, %arg5: memref<1x64xf32, #tpu.memory_space<vmem>>, %arg6: memref<64x32xbf16, #tpu.memory_space<vmem>>, %arg7: memref<1x32xf32, #tpu.memory_space<vmem>>, %arg8: memref<32x1xbf16, #tpu.memory_space<vmem>>, %arg9: memref<1x1xf32, #tpu.memory_space<vmem>>, %arg10: memref<128x1xf32, #tpu.memory_space<vmem>>) attributes {dimension_semantics = [#tpu.dimension_semantics<parallel>], iteration_bounds = array<i64: 2>, scalar_prefetch = 0 : i64, scratch_operands = 0 : i64, tpu.core_type = #tpu.core_type<tc>, window_params = [{transform_indices = @transform_0, window_bounds = array<i64: 128, 256>}, {pipeline_mode = #tpu.pipeline_mode<synchronous>, transform_indices = @transform_1, window_bounds = array<i64: 256, 128>}, {pipeline_mode = #tpu.pipeline_mode<synchronous>, transform_indices = @transform_2, window_bounds = array<i64: 1, 128>}, {pipeline_mode = #tpu.pipeline_mode<synchronous>, transform_indices = @transform_3, window_bounds = array<i64: 128, 64>}, {pipeline_mode = #tpu.pipeline_mode<synchronous>, transform_indices = @transform_4, window_bounds = array<i64: 1, 64>}, {pipeline_mode = #tpu.pipeline_mode<synchronous>, transform_indices = @transform_5, window_bounds = array<i64: 64, 32>}, {pipeline_mode = #tpu.pipeline_mode<synchronous>, transform_indices = @transform_6, window_bounds = array<i64: 1, 32>}, {pipeline_mode = #tpu.pipeline_mode<synchronous>, transform_indices = @transform_7, window_bounds = array<i64: 32, 1>}, {pipeline_mode = #tpu.pipeline_mode<synchronous>, transform_indices = @transform_8, window_bounds = array<i64: 1, 1>}, {transform_indices = @transform_9, window_bounds = array<i64: 128, 1>}]} {
    %c0 = arith.constant 0 : index
    %c0_0 = arith.constant 0 : index
    %0 = vector.load %arg1[%c0, %c0_0] : memref<128x256xbf16, #tpu.memory_space<vmem>>, vector<128x256xbf16>
    %c0_1 = arith.constant 0 : index
    %c0_2 = arith.constant 0 : index
    %1 = vector.load %arg2[%c0_1, %c0_2] : memref<256x128xbf16, #tpu.memory_space<vmem>>, vector<256x128xbf16>
    %cst = arith.constant dense<0.000000e+00> : vector<128x128xf32>
    %2 = tpu.matmul %0, %1, %cst {dimension_numbers = #tpu.dot_dimension_numbers<[1], [0], [0], [1], [0, 0, 1, 1], [], []>} : vector<128x256xbf16>, vector<256x128xbf16>, vector<128x128xf32> -> vector<128x128xf32>
    %c0_3 = arith.constant 0 : index
    %c0_4 = arith.constant 0 : index
    %3 = vector.load %arg3[%c0_3, %c0_4] : memref<1x128xf32, #tpu.memory_space<vmem>>, vector<1x128xf32>
    %4 = vector.broadcast %3 : vector<1x128xf32> to vector<128x128xf32>
    %5 = arith.addf %2, %4 : vector<128x128xf32>
    %cst_5 = arith.constant 2.000000e-01 : f32
    %6 = vector.broadcast %cst_5 : f32 to vector<128x128xf32>
    %7 = arith.mulf %6, %5 : vector<128x128xf32>
    %8 = arith.maximumf %5, %7 : vector<128x128xf32>
    %9 = arith.truncf %8 : vector<128x128xf32> to vector<128x128xbf16>
    %c0_6 = arith.constant 0 : index
    %c0_7 = arith.constant 0 : index
    %10 = vector.load %arg4[%c0_6, %c0_7] : memref<128x64xbf16, #tpu.memory_space<vmem>>, vector<128x64xbf16>
    %cst_8 = arith.constant dense<0.000000e+00> : vector<128x64xf32>
    %11 = tpu.matmul %9, %10, %cst_8 {dimension_numbers = #tpu.dot_dimension_numbers<[1], [0], [0], [1], [0, 0, 1, 1], [], []>} : vector<128x128xbf16>, vector<128x64xbf16>, vector<128x64xf32> -> vector<128x64xf32>
    %c0_9 = arith.constant 0 : index
    %c0_10 = arith.constant 0 : index
    %12 = vector.load %arg5[%c0_9, %c0_10] : memref<1x64xf32, #tpu.memory_space<vmem>>, vector<1x64xf32>
    %13 = vector.broadcast %12 : vector<1x64xf32> to vector<128x64xf32>
    %14 = arith.addf %11, %13 : vector<128x64xf32>
    %cst_11 = arith.constant 2.000000e-01 : f32
    %15 = vector.broadcast %cst_11 : f32 to vector<128x64xf32>
    %16 = arith.mulf %15, %14 : vector<128x64xf32>
    %17 = arith.maximumf %14, %16 : vector<128x64xf32>
    %18 = arith.truncf %17 : vector<128x64xf32> to vector<128x64xbf16>
    %c0_12 = arith.constant 0 : index
    %c0_13 = arith.constant 0 : index
    %19 = vector.load %arg6[%c0_12, %c0_13] : memref<64x32xbf16, #tpu.memory_space<vmem>>, vector<64x32xbf16>
    %cst_14 = arith.constant dense<0.000000e+00> : vector<128x32xf32>
    %20 = tpu.matmul %18, %19, %cst_14 {dimension_numbers = #tpu.dot_dimension_numbers<[1], [0], [0], [1], [0, 0, 1, 1], [], []>} : vector<128x64xbf16>, vector<64x32xbf16>, vector<128x32xf32> -> vector<128x32xf32>
    %c0_15 = arith.constant 0 : index
    %c0_16 = arith.constant 0 : index
    %21 = vector.load %arg7[%c0_15, %c0_16] : memref<1x32xf32, #tpu.memory_space<vmem>>, vector<1x32xf32>
    %22 = vector.broadcast %21 : vector<1x32xf32> to vector<128x32xf32>
    %23 = arith.addf %20, %22 : vector<128x32xf32>
    %cst_17 = arith.constant 2.000000e-01 : f32
    %24 = vector.broadcast %cst_17 : f32 to vector<128x32xf32>
    %25 = arith.mulf %24, %23 : vector<128x32xf32>
    %26 = arith.maximumf %23, %25 : vector<128x32xf32>
    %27 = arith.truncf %26 : vector<128x32xf32> to vector<128x32xbf16>
    %c0_18 = arith.constant 0 : index
    %c0_19 = arith.constant 0 : index
    %28 = vector.load %arg8[%c0_18, %c0_19] : memref<32x1xbf16, #tpu.memory_space<vmem>>, vector<32x1xbf16>
    %cst_20 = arith.constant dense<0.000000e+00> : vector<128x1xf32>
    %29 = tpu.matmul %27, %28, %cst_20 {dimension_numbers = #tpu.dot_dimension_numbers<[1], [0], [0], [1], [0, 0, 1, 1], [], []>} : vector<128x32xbf16>, vector<32x1xbf16>, vector<128x1xf32> -> vector<128x1xf32>
    %c0_21 = arith.constant 0 : index
    %c0_22 = arith.constant 0 : index
    %30 = vector.load %arg9[%c0_21, %c0_22] : memref<1x1xf32, #tpu.memory_space<vmem>>, vector<1x1xf32>
    %31 = vector.broadcast %30 : vector<1x1xf32> to vector<128x1xf32>
    %32 = arith.addf %29, %31 : vector<128x1xf32>
    %cst_23 = arith.constant 0.000000e+00 : f32
    %33 = vector.broadcast %cst_23 : f32 to vector<128x1xf32>
    %34 = arith.subf %33, %32 : vector<128x1xf32>
    %35 = math.exp %34 : vector<128x1xf32>
    %cst_24 = arith.constant 1.000000e+00 : f32
    %36 = vector.broadcast %cst_24 : f32 to vector<128x1xf32>
    %37 = arith.addf %36, %35 : vector<128x1xf32>
    %cst_25 = arith.constant 1.000000e+00 : f32
    %38 = vector.broadcast %cst_25 : f32 to vector<128x1xf32>
    %39 = arith.divf %38, %37 : vector<128x1xf32>
    %c0_26 = arith.constant 0 : index
    %c0_27 = arith.constant 0 : index
    %40 = vector.load %arg10[%c0_26, %c0_27] : memref<128x1xf32, #tpu.memory_space<vmem>>, vector<128x1xf32>
    tpu.vector_store %arg10[%c0_26, %c0_27], %39 {strides = array<i32>} : memref<128x1xf32, #tpu.memory_space<vmem>>, vector<128x1xf32>,
    return
  }
  func.func @transform_0(%arg0: i32) -> (i32, i32) {
    %c0_i32 = arith.constant 0 : i32
    %c0_i32_0 = arith.constant 0 : i32
    return %arg0, %c0_i32 : i32, i32
  }
  func.func @transform_1(%arg0: i32) -> (i32, i32) {
    %c0_i32 = arith.constant 0 : i32
    %c0_i32_0 = arith.constant 0 : i32
    %c0_i32_1 = arith.constant 0 : i32
    return %c0_i32, %c0_i32_0 : i32, i32
  }
  func.func @transform_2(%arg0: i32) -> (i32, i32) {
    %c0_i32 = arith.constant 0 : i32
    %c0_i32_0 = arith.constant 0 : i32
    %c0_i32_1 = arith.constant 0 : i32
    return %c0_i32, %c0_i32_0 : i32, i32
  }
  func.func @transform_3(%arg0: i32) -> (i32, i32) {
    %c0_i32 = arith.constant 0 : i32
    %c0_i32_0 = arith.constant 0 : i32
    %c0_i32_1 = arith.constant 0 : i32
    return %c0_i32, %c0_i32_0 : i32, i32
  }
  func.func @transform_4(%arg0: i32) -> (i32, i32) {
    %c0_i32 = arith.constant 0 : i32
    %c0_i32_0 = arith.constant 0 : i32
    %c0_i32_1 = arith.constant 0 : i32
    return %c0_i32, %c0_i32_0 : i32, i32
  }
  func.func @transform_5(%arg0: i32) -> (i32, i32) {
    %c0_i32 = arith.constant 0 : i32
    %c0_i32_0 = arith.constant 0 : i32
    %c0_i32_1 = arith.constant 0 : i32
    return %c0_i32, %c0_i32_0 : i32, i32
  }
  func.func @transform_6(%arg0: i32) -> (i32, i32) {
    %c0_i32 = arith.constant 0 : i32
    %c0_i32_0 = arith.constant 0 : i32
    %c0_i32_1 = arith.constant 0 : i32
    return %c0_i32, %c0_i32_0 : i32, i32
  }
  func.func @transform_7(%arg0: i32) -> (i32, i32) {
    %c0_i32 = arith.constant 0 : i32
    %c0_i32_0 = arith.constant 0 : i32
    %c0_i32_1 = arith.constant 0 : i32
    return %c0_i32, %c0_i32_0 : i32, i32
  }
  func.func @transform_8(%arg0: i32) -> (i32, i32) {
    %c0_i32 = arith.constant 0 : i32
    %c0_i32_0 = arith.constant 0 : i32
    %c0_i32_1 = arith.constant 0 : i32
    return %c0_i32, %c0_i32_0 : i32, i32
  }
  func.func @transform_9(%arg0: i32) -> (i32, i32) {
    %c0_i32 = arith.constant 0 : i32
    %c0_i32_0 = arith.constant 0 : i32
    return %arg0, %c0_i32 : i32, i32
  }
}

</mosaic_0001>

<llo_original>
// kernel: tpu_custom_call.1
$region0: #{tpu_custom_call.1}
  #allocation0 [shape = 'u32[]', space=smem, size = 0x4, offset = 0x4, fixed_abs, tag = 'smem constant byte address 0x4 - core index']
  #allocation1 [shape = 'u32[144,128]{1,0:T(1,128)}', space=vmem, size = 0x12000, scoped, tag = 'internal scratch']
  #allocation2 [shape = 'f32[1,1]{1,0:T(1,128)S(1)}', space=vmem, size = 0x200, scoped, tag = 'scoped memory for tpu_custom_call.1']
  %s0 = inlined_call_operand.hbm [shape: bf16[256,256], index: 0, kind: input, shape index: {}]
  %s1 = inlined_call_operand.vmem [shape: bf16[256,128], index: 1, kind: input, shape index: {}]
  %s2 = inlined_call_operand.hbm [shape: f32[1,128], index: 2, kind: input, shape index: {}]
  %s3 = inlined_call_operand.vmem [shape: bf16[128,64], index: 3, kind: input, shape index: {}]
  %s4 = inlined_call_operand.vmem [shape: f32[1,64], index: 4, kind: input, shape index: {}]
  %s5 = inlined_call_operand.vmem [shape: bf16[64,32], index: 5, kind: input, shape index: {}]
  %s6 = inlined_call_operand.vmem [shape: f32[1,32], index: 6, kind: input, shape index: {}]
  %s7 = inlined_call_operand.vmem [shape: bf16[32,1], index: 7, kind: input, shape index: {}]
  %s8 = inlined_call_operand.<no memory space> [shape: f32[1,1], index: 8, kind: input, shape index: {}]
  %s9 = inlined_call_operand.vmem [shape: f32[256,1], index: 9, kind: output, shape index: {}]
  %s10 = sld [smem:[#allocation0]]
  $region77: #{tpu_custom_call.1} parent=0
    _
  %s12 = ssub.s32 1, %s10
  %s13 = scalar_select 0, %s12, %s10
  %v14 = vstv %s8
  %15 = vst [vmem:[#allocation2] sm:$0x1] %v14
  $region1: #{tpu_custom_call.1} parent=0
    #allocation3 [shape = 'u8[131072]{0}', space=vmem, size = 0x20000, scoped, tag = 'input window, operand 0']
    #allocation4 [shape = 's32[2]{0}', space=sflag, size = 0x8, scoped, tag = 'scoped memory for tpu_custom_call.1']
    #allocation5 [shape = 'u8[512]{0}', space=vmem, size = 0x400, scoped, tag = 'input window, operand 2, single buffered']
    #allocation6 [shape = 's32[1]{0}', space=sflag, size = 0x4, scoped, tag = 'scoped memory for tpu_custom_call.1']
    %16 = vsyncpa [#allocation4], 0
    %s17 = scalar_lea.sflag [#allocation4], 1
    %18 = vsyncpa %s17, 0
    %19 = vsyncpa [#allocation6], 0
    loop: start=0, step=1, limit=4
    $region2: #{tpu_custom_call.1} parent=1 // loop_pre_header
      _
    $region3: #{tpu_custom_call.1} parent=1 // loop_header
      %s21 = sphi 0, %s25
      %p22 = scmp.ge.s32.totalorder %s21, 4
      %s31 = sphi 0, %s33
      %s34 = sphi 0, %s31
      %s35 = sphi 0, %s34
      %s51 = sphi 0, %s35
      %s55 = sphi 0, %s55
      %s57 = sphi 0, %s55
      %s58 = sphi 0, %s57
      %s72 = sphi 0, %s58
      %s76 = sphi 0, %s76
      %s78 = sphi 0, %s76
      %s79 = sphi 0, %s78
      %s93 = sphi 0, %s79
      %s97 = sphi 0, %s97
      %s99 = sphi 0, %s97
      %s100 = sphi 0, %s99
      %s114 = sphi 0, %s100
      %s118 = sphi 0, %s118
      %s120 = sphi 0, %s118
      %s121 = sphi 0, %s120
      %s135 = sphi 0, %s121
      %s139 = sphi 0, %s139
      %s141 = sphi 0, %s139
      %s142 = sphi 0, %s141
      %s156 = sphi 0, %s142
      %s160 = sphi 0, %s160
      %s162 = sphi 0, %s160
      %s163 = sphi 0, %s162
      %s177 = sphi 0, %s163
      %s181 = sphi 0, %s181
      %s183 = sphi 0, %s181
      %s184 = sphi 0, %s183
      %s198 = sphi 0, %s184
      %s202 = sphi 0, %s202
      %s204 = sphi 0, %s202
      %s205 = sphi 0, %s204
      %s219 = sphi 0, %s205
      %s225 = sphi 0, %s227
      %s228 = sphi 0, %s225
      %s229 = sphi 0, %s228
      %s245 = sphi 0, %s229
    $region4: #{tpu_custom_call.1} parent=1 // loop_header_branch
      %24 = sbr.rel (%p22) target = $region8
    $region5: #{tpu_custom_call.1} parent=1 // loop_body
      %s26 = ssub.s32 %s21, 1
      %s27 = ssub.s32 %s21, 2
      %s28 = sadd.s32 %s21, 1
      %s29 = ssub.s32 %s21, %s28
      %p30 = scmp.eq.s32.totalorder %s29, 0
      %s32 = sadd.s32 %s31, 1
      %s33 = scalar_select %p30, %s31, %s32
      %p36 = pneg %p30
      %p37 = scmp.eq.s32.totalorder %s21, 1
      %p38 = por %p36, %p37
      %p39 = scmp.ne.s32.totalorder %s31, %s34
      %p40 = scmp.eq.s32.totalorder %s21, 0
      %p41 = por %p39, %p40
      %p42 = scmp.ne.s32.totalorder %s31, %s34
      %p43 = scmp.eq.s32.totalorder %s26, 1
      %p44 = por %p42, %p43
      %p45 = scmp.ne.s32.totalorder %s34, %s35
      %p46 = scmp.eq.s32.totalorder %s26, 0
      %p47 = por %p45, %p46
      %p48 = scmp.ne.s32.totalorder %s34, %s35
      %p49 = scmp.eq.s32.totalorder %s27, 1
      %p50 = por %p48, %p49
      %p52 = scmp.ne.s32.totalorder %s35, %s51
      %p53 = scmp.eq.s32.totalorder %s27, 0
      %p54 = por %p52, %p53
      %s56 = sadd.s32 %s55, 1
      %p59 = scmp.eq.s32.totalorder %s21, 1
      %p60 = scmp.ne.s32.totalorder %s55, %s57
      %p61 = scmp.eq.s32.totalorder %s21, 0
      %p62 = por %p60, %p61
      %p63 = scmp.ne.s32.totalorder %s55, %s57
      %p64 = scmp.eq.s32.totalorder %s26, 1
      %p65 = por %p63, %p64
      %p66 = scmp.ne.s32.totalorder %s57, %s58
      %p67 = scmp.eq.s32.totalorder %s26, 0
      %p68 = por %p66, %p67
      %p69 = scmp.ne.s32.totalorder %s57, %s58
      %p70 = scmp.eq.s32.totalorder %s27, 1
      %p71 = por %p69, %p70
      %p73 = scmp.ne.s32.totalorder %s58, %s72
      %p74 = scmp.eq.s32.totalorder %s27, 0
      %p75 = por %p73, %p74
      %s77 = sadd.s32 %s76, 1
      %p80 = scmp.eq.s32.totalorder %s21, 1
      %p81 = scmp.ne.s32.totalorder %s76, %s78
      %p82 = scmp.eq.s32.totalorder %s21, 0
      %p83 = por %p81, %p82
      %p84 = scmp.ne.s32.totalorder %s76, %s78
      %p85 = scmp.eq.s32.totalorder %s26, 1
      %p86 = por %p84, %p85
      %p87 = scmp.ne.s32.totalorder %s78, %s79
      %p88 = scmp.eq.s32.totalorder %s26, 0
      %p89 = por %p87, %p88
      %p90 = scmp.ne.s32.totalorder %s78, %s79
      %p91 = scmp.eq.s32.totalorder %s27, 1
      %p92 = por %p90, %p91
      %p94 = scmp.ne.s32.totalorder %s79, %s93
      %p95 = scmp.eq.s32.totalorder %s27, 0
      %p96 = por %p94, %p95
      %s98 = sadd.s32 %s97, 1
      %p101 = scmp.eq.s32.totalorder %s21, 1
      %p102 = scmp.ne.s32.totalorder %s97, %s99
      %p103 = scmp.eq.s32.totalorder %s21, 0
      %p104 = por %p102, %p103
      %p105 = scmp.ne.s32.totalorder %s97, %s99
      %p106 = scmp.eq.s32.totalorder %s26, 1
      %p107 = por %p105, %p106
      %p108 = scmp.ne.s32.totalorder %s99, %s100
      %p109 = scmp.eq.s32.totalorder %s26, 0
      %p110 = por %p108, %p109
      %p111 = scmp.ne.s32.totalorder %s99, %s100
      %p112 = scmp.eq.s32.totalorder %s27, 1
      %p113 = por %p111, %p112
      %p115 = scmp.ne.s32.totalorder %s100, %s114
      %p116 = scmp.eq.s32.totalorder %s27, 0
      %p117 = por %p115, %p116
      %s119 = sadd.s32 %s118, 1
      %p122 = scmp.eq.s32.totalorder %s21, 1
      %p123 = scmp.ne.s32.totalorder %s118, %s120
      %p124 = scmp.eq.s32.totalorder %s21, 0
      %p125 = por %p123, %p124
      %p126 = scmp.ne.s32.totalorder %s118, %s120
      %p127 = scmp.eq.s32.totalorder %s26, 1
      %p128 = por %p126, %p127
      %p129 = scmp.ne.s32.totalorder %s120, %s121
      %p130 = scmp.eq.s32.totalorder %s26, 0
      %p131 = por %p129, %p130
      %p132 = scmp.ne.s32.totalorder %s120, %s121
      %p133 = scmp.eq.s32.totalorder %s27, 1
      %p134 = por %p132, %p133
      %p136 = scmp.ne.s32.totalorder %s121, %s135
      %p137 = scmp.eq.s32.totalorder %s27, 0
      %p138 = por %p136, %p137
      %s140 = sadd.s32 %s139, 1
      %p143 = scmp.eq.s32.totalorder %s21, 1
      %p144 = scmp.ne.s32.totalorder %s139, %s141
      %p145 = scmp.eq.s32.totalorder %s21, 0
      %p146 = por %p144, %p145
      %p147 = scmp.ne.s32.totalorder %s139, %s141
      %p148 = scmp.eq.s32.totalorder %s26, 1
      %p149 = por %p147, %p148
      %p150 = scmp.ne.s32.totalorder %s141, %s142
      %p151 = scmp.eq.s32.totalorder %s26, 0
      %p152 = por %p150, %p151
      %p153 = scmp.ne.s32.totalorder %s141, %s142
      %p154 = scmp.eq.s32.totalorder %s27, 1
      %p155 = por %p153, %p154
      %p157 = scmp.ne.s32.totalorder %s142, %s156
      %p158 = scmp.eq.s32.totalorder %s27, 0
      %p159 = por %p157, %p158
      %s161 = sadd.s32 %s160, 1
      %p164 = scmp.eq.s32.totalorder %s21, 1
      %p165 = scmp.ne.s32.totalorder %s160, %s162
      %p166 = scmp.eq.s32.totalorder %s21, 0
      %p167 = por %p165, %p166
      %p168 = scmp.ne.s32.totalorder %s160, %s162
      %p169 = scmp.eq.s32.totalorder %s26, 1
      %p170 = por %p168, %p169
      %p171 = scmp.ne.s32.totalorder %s162, %s163
      %p172 = scmp.eq.s32.totalorder %s26, 0
      %p173 = por %p171, %p172
      %p174 = scmp.ne.s32.totalorder %s162, %s163
      %p175 = scmp.eq.s32.totalorder %s27, 1
      %p176 = por %p174, %p175
      %p178 = scmp.ne.s32.totalorder %s163, %s177
      %p179 = scmp.eq.s32.totalorder %s27, 0
      %p180 = por %p178, %p179
      %s182 = sadd.s32 %s181, 1
      %p185 = scmp.eq.s32.totalorder %s21, 1
      %p186 = scmp.ne.s32.totalorder %s181, %s183
      %p187 = scmp.eq.s32.totalorder %s21, 0
      %p188 = por %p186, %p187
      %p189 = scmp.ne.s32.totalorder %s181, %s183
      %p190 = scmp.eq.s32.totalorder %s26, 1
      %p191 = por %p189, %p190
      %p192 = scmp.ne.s32.totalorder %s183, %s184
      %p193 = scmp.eq.s32.totalorder %s26, 0
      %p194 = por %p192, %p193
      %p195 = scmp.ne.s32.totalorder %s183, %s184
      %p196 = scmp.eq.s32.totalorder %s27, 1
      %p197 = por %p195, %p196
      %p199 = scmp.ne.s32.totalorder %s184, %s198
      %p200 = scmp.eq.s32.totalorder %s27, 0
      %p201 = por %p199, %p200
      %s203 = sadd.s32 %s202, 1
      %p206 = scmp.eq.s32.totalorder %s21, 1
      %p207 = scmp.ne.s32.totalorder %s202, %s204
      %p208 = scmp.eq.s32.totalorder %s21, 0
      %p209 = por %p207, %p208
      %p210 = scmp.ne.s32.totalorder %s202, %s204
      %p211 = scmp.eq.s32.totalorder %s26, 1
      %p212 = por %p210, %p211
      %p213 = scmp.ne.s32.totalorder %s204, %s205
      %p214 = scmp.eq.s32.totalorder %s26, 0
      %p215 = por %p213, %p214
      %p216 = scmp.ne.s32.totalorder %s204, %s205
      %p217 = scmp.eq.s32.totalorder %s27, 1
      %p218 = por %p216, %p217
      %p220 = scmp.ne.s32.totalorder %s205, %s219
      %p221 = scmp.eq.s32.totalorder %s27, 0
      %p222 = por %p220, %p221
      %s223 = ssub.s32 %s21, %s28
      %p224 = scmp.eq.s32.totalorder %s223, 0
      %s226 = sadd.s32 %s225, 1
      %s227 = scalar_select %p224, %s225, %s226
      %p230 = pneg %p224
      %p231 = scmp.eq.s32.totalorder %s21, 1
      %p232 = por %p230, %p231
      %p233 = scmp.ne.s32.totalorder %s225, %s228
      %p234 = scmp.eq.s32.totalorder %s21, 0
      %p235 = por %p233, %p234
      %p236 = scmp.ne.s32.totalorder %s225, %s228
      %p237 = scmp.eq.s32.totalorder %s26, 1
      %p238 = por %p236, %p237
      %p239 = scmp.ne.s32.totalorder %s228, %s229
      %p240 = scmp.eq.s32.totalorder %s26, 0
      %p241 = por %p239, %p240
      %p242 = scmp.ne.s32.totalorder %s228, %s229
      %p243 = scmp.eq.s32.totalorder %s27, 1
      %p244 = por %p242, %p243
      %p246 = scmp.ne.s32.totalorder %s229, %s245
      %p247 = scmp.eq.s32.totalorder %s27, 0
      %p248 = por %p246, %p247
      %p249 = scmp.le.s32.totalorder 1, %s21
      %p250 = scmp.lt.s32.totalorder %s21, 3
      %p251 = pnand %p249, %p250
      %p252 = pneg %p251
      // Predicated region
      $region9: #{tpu_custom_call.1} parent=5 // pred_check
        _
      $region10: #{tpu_custom_call.1} parent=5 // pred_check_branch
        %254 = sbr.rel (%p251) target = $region12
      $region11: #{tpu_custom_call.1} parent=5 // pred_region
        %s255 = ssub.s32 %s21, 1
        // Predicated region
        $region13: #{tpu_custom_call.1} parent=11 // pred_check
          %p256 = pneg %p68
        $region14: #{tpu_custom_call.1} parent=11 // pred_check_branch
          %258 = sbr.rel (%p256) target = $region16
        $region15: #{tpu_custom_call.1} parent=11 // pred_region
          _
        $region16: #{tpu_custom_call.1} parent=11 // pred_fallthru
          _
        // Predicated region
        $region17: #{tpu_custom_call.1} parent=11 // pred_check
          %p259 = pneg %p89
        $region18: #{tpu_custom_call.1} parent=11 // pred_check_branch
          %261 = sbr.rel (%p259) target = $region20
        $region19: #{tpu_custom_call.1} parent=11 // pred_region
          %s263 = ssub.s32 16, 16
          %264 = vsyncadd [#allocation6], %s263
          %s266 = sshll.u32 [#allocation5], 4
          %s267 = int_to_ptr.vmem [resolvable:$true] %s266
          %269 = dma.hbm_to_vmem [thread:$0]  %s2, 16, %s267, [#allocation6]
        $region20: #{tpu_custom_call.1} parent=11 // pred_fallthru
          _
        // Predicated region
        $region21: #{tpu_custom_call.1} parent=11 // pred_check
          %p270 = pneg %p110
        $region22: #{tpu_custom_call.1} parent=11 // pred_check_branch
          %272 = sbr.rel (%p270) target = $region24
        $region23: #{tpu_custom_call.1} parent=11 // pred_region
          _
        $region24: #{tpu_custom_call.1} parent=11 // pred_fallthru
          _
        // Predicated region
        $region25: #{tpu_custom_call.1} parent=11 // pred_check
          %p273 = pneg %p131
        $region26: #{tpu_custom_call.1} parent=11 // pred_check_branch
          %275 = sbr.rel (%p273) target = $region28
        $region27: #{tpu_custom_call.1} parent=11 // pred_region
          _
        $region28: #{tpu_custom_call.1} parent=11 // pred_fallthru
          _
        // Predicated region
        $region29: #{tpu_custom_call.1} parent=11 // pred_check
          %p276 = pneg %p152
        $region30: #{tpu_custom_call.1} parent=11 // pred_check_branch
          %278 = sbr.rel (%p276) target = $region32
        $region31: #{tpu_custom_call.1} parent=11 // pred_region
          _
        $region32: #{tpu_custom_call.1} parent=11 // pred_fallthru
          _
        // Predicated region
        $region33: #{tpu_custom_call.1} parent=11 // pred_check
          %p279 = pneg %p173
        $region34: #{tpu_custom_call.1} parent=11 // pred_check_branch
          %281 = sbr.rel (%p279) target = $region36
        $region35: #{tpu_custom_call.1} parent=11 // pred_region
          _
        $region36: #{tpu_custom_call.1} parent=11 // pred_fallthru
          _
        // Predicated region
        $region37: #{tpu_custom_call.1} parent=11 // pred_check
          %p282 = pneg %p194
        $region38: #{tpu_custom_call.1} parent=11 // pred_check_branch
          %284 = sbr.rel (%p282) target = $region40
        $region39: #{tpu_custom_call.1} parent=11 // pred_region
          _
        $region40: #{tpu_custom_call.1} parent=11 // pred_fallthru
          _
        // Predicated region
        $region41: #{tpu_custom_call.1} parent=11 // pred_check
          %p285 = pneg %p215
        $region42: #{tpu_custom_call.1} parent=11 // pred_check_branch
          %287 = sbr.rel (%p285) target = $region44
        $region43: #{tpu_custom_call.1} parent=11 // pred_region
          _
        $region44: #{tpu_custom_call.1} parent=11 // pred_fallthru
          _
      $region12: #{tpu_custom_call.1} parent=5 // pred_fallthru
        _
      %p288 = scmp.lt.s32.totalorder %s21, 2
      // Predicated region
      $region45: #{tpu_custom_call.1} parent=5 // pred_check
        %p289 = pneg %p288
      $region46: #{tpu_custom_call.1} parent=5 // pred_check_branch
        %291 = sbr.rel (%p289) target = $region48
      $region47: #{tpu_custom_call.1} parent=5 // pred_region
        // Predicated region
        $region49: #{tpu_custom_call.1} parent=47 // pred_check
          %p292 = pneg %p41
        $region50: #{tpu_custom_call.1} parent=47 // pred_check_branch
          %294 = sbr.rel (%p292) target = $region52
        $region51: #{tpu_custom_call.1} parent=47 // pred_region
          %s295 = sand.u32 %s31, 1
          %s296 = scalar_lea.sflag [#allocation4], %s295
          %s297 = sand.u32 %s31, 1
          %s298 = smul.addr %s297, 128
          %s299 = scalar_lea.vmem [#allocation3], %s298
          %s300 = smul.u32 16, %s21
          %s302 = ssub.s32 2048, 2048
          %303 = vsyncadd %s296, %s302
          %s304 = smul.addr %s300, 2
          %s305 = smul.addr %s304, 64
          %s306 = scalar_lea.hbm %s0, %s305
          %s307 = sshll.u32 %s299, 4
          %s308 = int_to_ptr.vmem [resolvable:$true] %s307
          %313 = dma.hbm_to_vmem [thread:$0]  %s306, 2048, %s308, %s296, 128, 128, 8
        $region52: #{tpu_custom_call.1} parent=47 // pred_fallthru
          _
      $region48: #{tpu_custom_call.1} parent=5 // pred_fallthru
        _
      %p314 = scmp.le.s32.totalorder 1, %s21
      %p315 = scmp.lt.s32.totalorder %s21, 3
      %p316 = pnand %p314, %p315
      %p317 = pneg %p316
      // Predicated region
      $region53: #{tpu_custom_call.1} parent=5 // pred_check
        _
      $region54: #{tpu_custom_call.1} parent=5 // pred_check_branch
        %319 = sbr.rel (%p316) target = $region56
      $region55: #{tpu_custom_call.1} parent=5 // pred_region
        %s320 = ssub.s32 %s21, 1
        %s321 = sand.u32 %s34, 1
        %s322 = scalar_lea.sflag [#allocation4], %s321
        %s323 = sand.u32 %s34, 1
        %s324 = smul.addr %s323, 128
        %s325 = scalar_lea.vmem [#allocation3], %s324
        // Predicated region
        $region57: #{tpu_custom_call.1} parent=55 // pred_check
          %p326 = pneg %p47
        $region58: #{tpu_custom_call.1} parent=55 // pred_check_branch
          %328 = sbr.rel (%p326) target = $region60
        $region59: #{tpu_custom_call.1} parent=55 // pred_region
          %329 = dma.done %s322, 2048
        $region60: #{tpu_custom_call.1} parent=55 // pred_fallthru
          _
        // Predicated region
        $region61: #{tpu_custom_call.1} parent=55 // pred_check
          %p330 = pneg %p89
        $region62: #{tpu_custom_call.1} parent=55 // pred_check_branch
          %332 = sbr.rel (%p330) target = $region64
        $region63: #{tpu_custom_call.1} parent=55 // pred_region
          %333 = dma.done [#allocation6], 16
        $region64: #{tpu_custom_call.1} parent=55 // pred_fallthru
          _
        %s334 = sand.u32 %s34, 1
        %s335 = scalar_lea.sflag [#allocation4], %s334
        %s336 = sand.u32 %s34, 1
        %s337 = smul.addr %s336, 128
        %s338 = scalar_lea.vmem [#allocation3], %s337
        %p339 = pneg %p47
        %p340 = pneg %p44
        %p341 = pneg %p68
        %p342 = pneg %p65
        %p343 = pneg %p89
        %p344 = pneg %p86
        %p345 = pneg %p110
        %p346 = pneg %p107
        %p347 = pneg %p131
        %p348 = pneg %p128
        %p349 = pneg %p152
        %p350 = pneg %p149
        %p351 = pneg %p173
        %p352 = pneg %p170
        %p353 = pneg %p194
        %p354 = pneg %p191
        %p355 = pneg %p215
        %p356 = pneg %p212
        %p357 = pneg %p241
        %p358 = pneg %p238
        %s359 = smul.u32 16, %s26
        %p360 = scmp.lt.s32.totalorder %s359, 31
        %s361 = scalar_select %p360, %s359, 31
        %s362 = smul.addr %s361, 8
        %s363 = scalar_lea.vmem %s9, %s362
        %s364 = smul.u32 16, %s26
        %s365 = smul.u32 16, %s26
        %p366 = scmp.lt.s32.totalorder %s365, 31
        %s367 = scalar_select %p366, %s365, 31
        %s368 = smul.addr %s367, 8
        %s369 = scalar_lea.vmem %s9, %s368
        %s370 = smul.u32 16, %s26
        %v372 = vld [vmem:[%s325] sm:$0xff]
        %v373 = vld [vmem:[%s325 + $0x8] sm:$0xff]
        %v374 = vld [vmem:[%s325 + $0x10] sm:$0xff]
        %v375 = vld [vmem:[%s325 + $0x18] sm:$0xff]
        %v376 = vld [vmem:[%s325 + $0x20] sm:$0xff]
        %v377 = vld [vmem:[%s325 + $0x28] sm:$0xff]
        %v378 = vld [vmem:[%s325 + $0x30] sm:$0xff]
        %v379 = vld [vmem:[%s325 + $0x38] sm:$0xff]
        %v380 = vld [vmem:[%s325 + $0x40] sm:$0xff]
        %v381 = vld [vmem:[%s325 + $0x48] sm:$0xff]
        %v382 = vld [vmem:[%s325 + $0x50] sm:$0xff]
        %v383 = vld [vmem:[%s325 + $0x58] sm:$0xff]
        %v384 = vld [vmem:[%s325 + $0x60] sm:$0xff]
        %v385 = vld [vmem:[%s325 + $0x68] sm:$0xff]
        %v386 = vld [vmem:[%s325 + $0x70] sm:$0xff]
        %v387 = vld [vmem:[%s325 + $0x78] sm:$0xff]
        %v388 = vld [vmem:[%s1] sm:$0xf]
        %v389 = vld [vmem:[%s1 + $0x4] sm:$0xf]
        %v390 = vld [vmem:[%s1 + $0x8] sm:$0xf]
        %v391 = vld [vmem:[%s1 + $0xc] sm:$0xf]
        %v392 = vld [vmem:[%s1 + $0x10] sm:$0xf]
        %v393 = vld [vmem:[%s1 + $0x14] sm:$0xf]
        %v394 = vld [vmem:[%s1 + $0x18] sm:$0xf]
        %v395 = vld [vmem:[%s1 + $0x1c] sm:$0xf]
        %v396 = vld [vmem:[%s1 + $0x20] sm:$0xf]
        %v397 = vld [vmem:[%s1 + $0x24] sm:$0xf]
        %v398 = vld [vmem:[%s1 + $0x28] sm:$0xf]
        %v399 = vld [vmem:[%s1 + $0x2c] sm:$0xf]
        %v400 = vld [vmem:[%s1 + $0x30] sm:$0xf]
        %v401 = vld [vmem:[%s1 + $0x34] sm:$0xf]
        %v402 = vld [vmem:[%s1 + $0x38] sm:$0xf]
        %v403 = vld [vmem:[%s1 + $0x3c] sm:$0xf]
        %v404 = vld [vmem:[%s1 + $0x40] sm:$0xf]
        %v405 = vld [vmem:[%s1 + $0x44] sm:$0xf]
        %v406 = vld [vmem:[%s1 + $0x48] sm:$0xf]
        %v407 = vld [vmem:[%s1 + $0x4c] sm:$0xf]
        %v408 = vld [vmem:[%s1 + $0x50] sm:$0xf]
        %v409 = vld [vmem:[%s1 + $0x54] sm:$0xf]
        %v410 = vld [vmem:[%s1 + $0x58] sm:$0xf]
        %v411 = vld [vmem:[%s1 + $0x5c] sm:$0xf]
        %v412 = vld [vmem:[%s1 + $0x60] sm:$0xf]
        %v413 = vld [vmem:[%s1 + $0x64] sm:$0xf]
        %v414 = vld [vmem:[%s1 + $0x68] sm:$0xf]
        %v415 = vld [vmem:[%s1 + $0x6c] sm:$0xf]
        %v416 = vld [vmem:[%s1 + $0x70] sm:$0xf]
        %v417 = vld [vmem:[%s1 + $0x74] sm:$0xf]
        %v418 = vld [vmem:[%s1 + $0x78] sm:$0xf]
        %v419 = vld [vmem:[%s1 + $0x7c] sm:$0xf]
        %v420 = vld [vmem:[#allocation5] sm:$0x1]
        %v422 = vlaneseq
        %v423 = vshrl.u32 %v422, 7
        %v424 = vsub.s32 0, %v423
        %v425 = vrot.slane %v420, %v424
        %v443 = vunpack.c.l.b16 %v372
        %v444 = vunpack.c.h.b16 %v372
        %v445 = vunpack.c.l.b16 %v373
        %v446 = vunpack.c.h.b16 %v373
        %v447 = vunpack.c.l.b16 %v374
        %v448 = vunpack.c.h.b16 %v374
        %v449 = vunpack.c.l.b16 %v375
        %v450 = vunpack.c.h.b16 %v375
        %v451 = vunpack.c.l.b16 %v376
        %v452 = vunpack.c.h.b16 %v376
        %v453 = vunpack.c.l.b16 %v377
        %v454 = vunpack.c.h.b16 %v377
        %v455 = vunpack.c.l.b16 %v378
        %v456 = vunpack.c.h.b16 %v378
        %v457 = vunpack.c.l.b16 %v379
        %v458 = vunpack.c.h.b16 %v379
        %v459 = vunpack.c.l.b16 %v380
        %v460 = vunpack.c.h.b16 %v380
        %v461 = vunpack.c.l.b16 %v381
        %v462 = vunpack.c.h.b16 %v381
        %v463 = vunpack.c.l.b16 %v382
        %v464 = vunpack.c.h.b16 %v382
        %v465 = vunpack.c.l.b16 %v383
        %v466 = vunpack.c.h.b16 %v383
        %v467 = vunpack.c.l.b16 %v384
        %v468 = vunpack.c.h.b16 %v384
        %v469 = vunpack.c.l.b16 %v385
        %v470 = vunpack.c.h.b16 %v385
        %v471 = vunpack.c.l.b16 %v386
        %v472 = vunpack.c.h.b16 %v386
        %v473 = vunpack.c.l.b16 %v387
        %v474 = vunpack.c.h.b16 %v387
        %v475 = vpack.c.b16 %v445, %v443
        %v476 = vpack.c.b16 %v446, %v444
        %v477 = vpack.c.b16 %v449, %v447
        %v478 = vpack.c.b16 %v450, %v448
        %v479 = vpack.c.b16 %v453, %v451
        %v480 = vpack.c.b16 %v454, %v452
        %v481 = vpack.c.b16 %v457, %v455
        %v482 = vpack.c.b16 %v458, %v456
        %v483 = vpack.c.b16 %v461, %v459
        %v484 = vpack.c.b16 %v462, %v460
        %v485 = vpack.c.b16 %v465, %v463
        %v486 = vpack.c.b16 %v466, %v464
        %v487 = vpack.c.b16 %v469, %v467
        %v488 = vpack.c.b16 %v470, %v468
        %v489 = vpack.c.b16 %v473, %v471
        %v490 = vpack.c.b16 %v474, %v472
        %v539 = vunpack.c.l.b16 %v388
        %v540 = vunpack.c.l.b16 %v389
        %v541 = vunpack.c.l.b16 %v390
        %v542 = vunpack.c.l.b16 %v391
        %v543 = vunpack.c.l.b16 %v392
        %v544 = vunpack.c.l.b16 %v393
        %v545 = vunpack.c.l.b16 %v394
        %v546 = vunpack.c.l.b16 %v395
        %v547 = vunpack.c.l.b16 %v396
        %v548 = vunpack.c.l.b16 %v397
        %v549 = vunpack.c.l.b16 %v398
        %v550 = vunpack.c.l.b16 %v399
        %v551 = vunpack.c.l.b16 %v400
        %v552 = vunpack.c.l.b16 %v401
        %v553 = vunpack.c.l.b16 %v402
        %v554 = vunpack.c.l.b16 %v403
        %v555 = vunpack.c.l.b16 %v404
        %v556 = vunpack.c.l.b16 %v405
        %v557 = vunpack.c.l.b16 %v406
        %v558 = vunpack.c.l.b16 %v407
        %v559 = vunpack.c.l.b16 %v408
        %v560 = vunpack.c.l.b16 %v409
        %v561 = vunpack.c.l.b16 %v410
        %v562 = vunpack.c.l.b16 %v411
        %v563 = vunpack.c.l.b16 %v412
        %v564 = vunpack.c.l.b16 %v413
        %v565 = vunpack.c.l.b16 %v414
        %v566 = vunpack.c.l.b16 %v415
        %v567 = vunpack.c.l.b16 %v416
        %v568 = vunpack.c.l.b16 %v417
        %v569 = vunpack.c.l.b16 %v418
        %v570 = vunpack.c.l.b16 %v419
        %v571 = vpack.c.b16 %v540, %v539
        %v572 = vpack.c.b16 %v542, %v541
        %v573 = vpack.c.b16 %v544, %v543
        %v574 = vpack.c.b16 %v546, %v545
        %v575 = vpack.c.b16 %v548, %v547
        %v576 = vpack.c.b16 %v550, %v549
        %v577 = vpack.c.b16 %v552, %v551
        %v578 = vpack.c.b16 %v554, %v553
        %v579 = vpack.c.b16 %v556, %v555
        %v580 = vpack.c.b16 %v558, %v557
        %v581 = vpack.c.b16 %v560, %v559
        %v582 = vpack.c.b16 %v562, %v561
        %v583 = vpack.c.b16 %v564, %v563
        %v584 = vpack.c.b16 %v566, %v565
        %v585 = vpack.c.b16 %v568, %v567
        %v586 = vpack.c.b16 %v570, %v569
        %603 = vmatprep.subr.bf16.mxu0 0
        %604 = vmatpush1.bf16.msra.mxu0 %v571
        %605 = vmatprep.subr.bf16.mxu0 0
        %606 = vmatpush1.bf16.msra.mxu0 %v572
        %607 = vmatprep.subr.bf16.mxu0 0
        %608 = vmatpush1.bf16.msra.mxu0 %v573
        %609 = vmatprep.subr.bf16.mxu0 0
        %610 = vmatpush1.bf16.msra.mxu0 %v574
        %611 = vmatprep.subr.bf16.mxu0 0
        %612 = vmatpush1.bf16.msra.mxu0 %v575
        %613 = vmatprep.subr.bf16.mxu0 0
        %614 = vmatpush1.bf16.msra.mxu0 %v576
        %615 = vmatprep.subr.bf16.mxu0 0
        %616 = vmatpush1.bf16.msra.mxu0 %v577
        %617 = vmatprep.subr.bf16.mxu0 0
        %618 = vmatpush1.bf16.msra.mxu0 %v578
        %619 = vmatprep.subr.bf16.mxu0 0
        %620 = vmatpush1.bf16.msra.mxu0 %v579
        %621 = vmatprep.subr.bf16.mxu0 0
        %622 = vmatpush1.bf16.msra.mxu0 %v580
        %623 = vmatprep.subr.bf16.mxu0 0
        %624 = vmatpush1.bf16.msra.mxu0 %v581
        %625 = vmatprep.subr.bf16.mxu0 0
        %626 = vmatpush1.bf16.msra.mxu0 %v582
        %627 = vmatprep.subr.bf16.mxu0 0
        %628 = vmatpush1.bf16.msra.mxu0 %v583
        %629 = vmatprep.subr.bf16.mxu0 0
        %630 = vmatpush1.bf16.msra.mxu0 %v584
        %631 = vmatprep.subr.bf16.mxu0 0
        %632 = vmatpush1.bf16.msra.mxu0 %v585
        %633 = vmatprep.subr.bf16.mxu0 0
        %634 = vmatpush1.bf16.msra.mxu0 %v586
        %635 = vmatprep.mubr.bf16.mxu0 %v476
        %636 = vmatmul.mubr.bf16.gmra.mrb[0].mxu0 %v475
        %v637 = vpop.f32.mrb[0].mxu0
        %v638 = vadd.f32 %v425, %v637
        %v639 = vpop.f32.mrb[0].mxu0
        %v640 = vpop.f32.mrb[0].mxu0
        %v641 = vadd.f32 %v425, %v640
        %v642 = vpop.f32.mrb[0].mxu0
        %643 = vmatprep.mubr.bf16.mxu0 %v478
        %644 = vmatmul.mubr.bf16.gmra.mrb[0].mxu0 %v477
        %v645 = vpop.f32.mrb[0].mxu0
        %v646 = vadd.f32 %v425, %v645
        %v647 = vpop.f32.mrb[0].mxu0
        %v648 = vpop.f32.mrb[0].mxu0
        %v649 = vadd.f32 %v425, %v648
        %v650 = vpop.f32.mrb[0].mxu0
        %651 = vmatprep.mubr.bf16.mxu0 %v480
        %652 = vmatmul.mubr.bf16.gmra.mrb[0].mxu0 %v479
        %v653 = vpop.f32.mrb[0].mxu0
        %v654 = vadd.f32 %v425, %v653
        %v655 = vpop.f32.mrb[0].mxu0
        %v656 = vpop.f32.mrb[0].mxu0
        %v657 = vadd.f32 %v425, %v656
        %v658 = vpop.f32.mrb[0].mxu0
        %659 = vmatprep.mubr.bf16.mxu0 %v482
        %660 = vmatmul.mubr.bf16.gmra.mrb[0].mxu0 %v481
        %v661 = vpop.f32.mrb[0].mxu0
        %v662 = vadd.f32 %v425, %v661
        %v663 = vpop.f32.mrb[0].mxu0
        %v664 = vpop.f32.mrb[0].mxu0
        %v665 = vadd.f32 %v425, %v664
        %v666 = vpop.f32.mrb[0].mxu0
        %667 = vmatprep.mubr.bf16.mxu0 %v484
        %668 = vmatmul.mubr.bf16.gmra.mrb[0].mxu0 %v483
        %v669 = vpop.f32.mrb[0].mxu0
        %v670 = vadd.f32 %v425, %v669
        %v671 = vpop.f32.mrb[0].mxu0
        %v672 = vpop.f32.mrb[0].mxu0
        %v673 = vadd.f32 %v425, %v672
        %v674 = vpop.f32.mrb[0].mxu0
        %675 = vmatprep.mubr.bf16.mxu0 %v486
        %676 = vmatmul.mubr.bf16.gmra.mrb[0].mxu0 %v485
        %v677 = vpop.f32.mrb[0].mxu0
        %v678 = vadd.f32 %v425, %v677
        %v679 = vpop.f32.mrb[0].mxu0
        %v680 = vpop.f32.mrb[0].mxu0
        %v681 = vadd.f32 %v425, %v680
        %v682 = vpop.f32.mrb[0].mxu0
        %683 = vmatprep.mubr.bf16.mxu0 %v488
        %684 = vmatmul.mubr.bf16.gmra.mrb[0].mxu0 %v487
        %v685 = vpop.f32.mrb[0].mxu0
        %v686 = vadd.f32 %v425, %v685
        %v687 = vpop.f32.mrb[0].mxu0
        %v688 = vpop.f32.mrb[0].mxu0
        %v689 = vadd.f32 %v425, %v688
        %v690 = vpop.f32.mrb[0].mxu0
        %691 = vmatprep.mubr.bf16.mxu0 %v490
        %692 = vmatmul.mubr.bf16.gmra.mrb[0].mxu0 %v489
        %v693 = vpop.f32.mrb[0].mxu0
        %v694 = vadd.f32 %v425, %v693
        %v695 = vpop.f32.mrb[0].mxu0
        %v696 = vpop.f32.mrb[0].mxu0
        %v697 = vadd.f32 %v425, %v696
        %v698 = vpop.f32.mrb[0].mxu0
        %699 = vdwg.mxu0
        %v700 = vmul.f32 %v638, 0.2
        %v701 = vmul.f32 %v641, 0.2
        %v702 = vmul.f32 %v646, 0.2
        %v703 = vmul.f32 %v649, 0.2
        %v704 = vmul.f32 %v654, 0.2
        %v705 = vmul.f32 %v657, 0.2
        %v706 = vmul.f32 %v662, 0.2
        %v707 = vmul.f32 %v665, 0.2
        %v708 = vmul.f32 %v670, 0.2
        %v709 = vmul.f32 %v673, 0.2
        %v710 = vmul.f32 %v678, 0.2
        %v711 = vmul.f32 %v681, 0.2
        %v712 = vmul.f32 %v686, 0.2
        %v713 = vmul.f32 %v689, 0.2
        %v714 = vmul.f32 %v694, 0.2
        %v715 = vmul.f32 %v697, 0.2
        %v716 = vmax.f32 %v638, %v700
        %v717 = vmax.f32 %v641, %v701
        %v718 = vmax.f32 %v646, %v702
        %v719 = vmax.f32 %v649, %v703
        %v720 = vmax.f32 %v654, %v704
        %v721 = vmax.f32 %v657, %v705
        %v722 = vmax.f32 %v662, %v706
        %v723 = vmax.f32 %v665, %v707
        %v724 = vmax.f32 %v670, %v708
        %v725 = vmax.f32 %v673, %v709
        %v726 = vmax.f32 %v678, %v710
        %v727 = vmax.f32 %v681, %v711
        %v728 = vmax.f32 %v686, %v712
        %v729 = vmax.f32 %v689, %v713
        %v730 = vmax.f32 %v694, %v714
        %v731 = vmax.f32 %v697, %v715
        %v732 = vpack.c.bf16 %v717, %v716
        %v733 = vpack.c.bf16 %v719, %v718
        %v734 = vpack.c.bf16 %v721, %v720
        %v735 = vpack.c.bf16 %v723, %v722
        %v736 = vpack.c.bf16 %v725, %v724
        %v737 = vpack.c.bf16 %v727, %v726
        %v738 = vpack.c.bf16 %v729, %v728
        %v739 = vpack.c.bf16 %v731, %v730
        %v740 = vld [vmem:[%s3] sm:$0xf]
        %v741 = vld [vmem:[%s3 + $0x4] sm:$0xf]
        %v742 = vld [vmem:[%s3 + $0x8] sm:$0xf]
        %v743 = vld [vmem:[%s3 + $0xc] sm:$0xf]
        %v744 = vld [vmem:[%s3 + $0x10] sm:$0xf]
        %v745 = vld [vmem:[%s3 + $0x14] sm:$0xf]
        %v746 = vld [vmem:[%s3 + $0x18] sm:$0xf]
        %v747 = vld [vmem:[%s3 + $0x1c] sm:$0xf]
        %v748 = vld [vmem:[%s3 + $0x20] sm:$0xf]
        %v749 = vld [vmem:[%s3 + $0x24] sm:$0xf]
        %v750 = vld [vmem:[%s3 + $0x28] sm:$0xf]
        %v751 = vld [vmem:[%s3 + $0x2c] sm:$0xf]
        %v752 = vld [vmem:[%s3 + $0x30] sm:$0xf]
        %v753 = vld [vmem:[%s3 + $0x34] sm:$0xf]
        %v754 = vld [vmem:[%s3 + $0x38] sm:$0xf]
        %v755 = vld [vmem:[%s3 + $0x3c] sm:$0xf]
        %v756 = vld [vmem:[%s4] sm:$0x1]
        %v758 = vlaneseq
        %v759 = vshrl.u32 %v758, 7
        %v760 = vsub.s32 0, %v759
        %v761 = vrot.slane %v756, %v760
        %v779 = vunpack.c.l.b16 %v740
        %v780 = vunpack.c.l.b16 %v741
        %v781 = vunpack.c.l.b16 %v742
        %v782 = vunpack.c.l.b16 %v743
        %v783 = vunpack.c.l.b16 %v744
        %v784 = vunpack.c.l.b16 %v745
        %v785 = vunpack.c.l.b16 %v746
        %v786 = vunpack.c.l.b16 %v747
        %v787 = vunpack.c.l.b16 %v748
        %v788 = vunpack.c.l.b16 %v749
        %v789 = vunpack.c.l.b16 %v750
        %v790 = vunpack.c.l.b16 %v751
        %v791 = vunpack.c.l.b16 %v752
        %v792 = vunpack.c.l.b16 %v753
        %v793 = vunpack.c.l.b16 %v754
        %v794 = vunpack.c.l.b16 %v755
        %v795 = vpack.c.b16 %v780, %v779
        %v796 = vpack.c.b16 %v782, %v781
        %v797 = vpack.c.b16 %v784, %v783
        %v798 = vpack.c.b16 %v786, %v785
        %v799 = vpack.c.b16 %v788, %v787
        %v800 = vpack.c.b16 %v790, %v789
        %v801 = vpack.c.b16 %v792, %v791
        %v802 = vpack.c.b16 %v794, %v793
        %811 = vmatprep.subr.bf16.mxu0 0
        %812 = vmatpush1.bf16.msra.mxu0 %v795
        %813 = vmatprep.subr.bf16.mxu0 0
        %814 = vmatpush1.bf16.msra.mxu0 %v796
        %815 = vmatprep.subr.bf16.mxu0 0
        %816 = vmatpush1.bf16.msra.mxu0 %v797
        %817 = vmatprep.subr.bf16.mxu0 0
        %818 = vmatpush1.bf16.msra.mxu0 %v798
        %819 = vmatprep.subr.bf16.mxu0 0
        %820 = vmatpush1.bf16.msra.mxu0 %v799
        %821 = vmatprep.subr.bf16.mxu0 0
        %822 = vmatpush1.bf16.msra.mxu0 %v800
        %823 = vmatprep.subr.bf16.mxu0 0
        %824 = vmatpush1.bf16.msra.mxu0 %v801
        %825 = vmatprep.subr.bf16.mxu0 0
        %826 = vmatpush1.bf16.msra.mxu0 %v802
        %827 = vmatprep.subr.bf16.mxu0 0
        %828 = vmatpush1.bf16.msra.mxu0 0
        %829 = vmatprep.subr.bf16.mxu0 0
        %830 = vmatpush1.bf16.msra.mxu0 0
        %831 = vmatprep.subr.bf16.mxu0 0
        %832 = vmatpush1.bf16.msra.mxu0 0
        %833 = vmatprep.subr.bf16.mxu0 0
        %834 = vmatpush1.bf16.msra.mxu0 0
        %835 = vmatprep.subr.bf16.mxu0 0
        %836 = vmatpush1.bf16.msra.mxu0 0
        %837 = vmatprep.subr.bf16.mxu0 0
        %838 = vmatpush1.bf16.msra.mxu0 0
        %839 = vmatprep.subr.bf16.mxu0 0
        %840 = vmatpush1.bf16.msra.mxu0 0
        %841 = vmatprep.subr.bf16.mxu0 0
        %842 = vmatpush1.bf16.msra.mxu0 0
        %843 = vmatprep.mubr.bf16.mxu0 0
        %844 = vmatmul.mubr.bf16.gmra.mrb[0].mxu0 %v732
        %v845 = vpop.f32.mrb[0].mxu0
        %v846 = vadd.f32 %v761, %v845
        %v847 = vpop.f32.mrb[0].mxu0
        %v848 = vpop.f32.mrb[0].mxu0
        %v849 = vadd.f32 %v761, %v848
        %v850 = vpop.f32.mrb[0].mxu0
        %851 = vmatprep.mubr.bf16.mxu0 0
        %852 = vmatmul.mubr.bf16.gmra.mrb[0].mxu0 %v733
        %v853 = vpop.f32.mrb[0].mxu0
        %v854 = vadd.f32 %v761, %v853
        %v855 = vpop.f32.mrb[0].mxu0
        %v856 = vpop.f32.mrb[0].mxu0
        %v857 = vadd.f32 %v761, %v856
        %v858 = vpop.f32.mrb[0].mxu0
        %859 = vmatprep.mubr.bf16.mxu0 0
        %860 = vmatmul.mubr.bf16.gmra.mrb[0].mxu0 %v734
        %v861 = vpop.f32.mrb[0].mxu0
        %v862 = vadd.f32 %v761, %v861
        %v863 = vpop.f32.mrb[0].mxu0
        %v864 = vpop.f32.mrb[0].mxu0
        %v865 = vadd.f32 %v761, %v864
        %v866 = vpop.f32.mrb[0].mxu0
        %867 = vmatprep.mubr.bf16.mxu0 0
        %868 = vmatmul.mubr.bf16.gmra.mrb[0].mxu0 %v735
        %v869 = vpop.f32.mrb[0].mxu0
        %v870 = vadd.f32 %v761, %v869
        %v871 = vpop.f32.mrb[0].mxu0
        %v872 = vpop.f32.mrb[0].mxu0
        %v873 = vadd.f32 %v761, %v872
        %v874 = vpop.f32.mrb[0].mxu0
        %875 = vmatprep.mubr.bf16.mxu0 0
        %876 = vmatmul.mubr.bf16.gmra.mrb[0].mxu0 %v736
        %v877 = vpop.f32.mrb[0].mxu0
        %v878 = vadd.f32 %v761, %v877
        %v879 = vpop.f32.mrb[0].mxu0
        %v880 = vpop.f32.mrb[0].mxu0
        %v881 = vadd.f32 %v761, %v880
        %v882 = vpop.f32.mrb[0].mxu0
        %883 = vmatprep.mubr.bf16.mxu0 0
        %884 = vmatmul.mubr.bf16.gmra.mrb[0].mxu0 %v737
        %v885 = vpop.f32.mrb[0].mxu0
        %v886 = vadd.f32 %v761, %v885
        %v887 = vpop.f32.mrb[0].mxu0
        %v888 = vpop.f32.mrb[0].mxu0
        %v889 = vadd.f32 %v761, %v888
        %v890 = vpop.f32.mrb[0].mxu0
        %891 = vmatprep.mubr.bf16.mxu0 0
        %892 = vmatmul.mubr.bf16.gmra.mrb[0].mxu0 %v738
        %v893 = vpop.f32.mrb[0].mxu0
        %v894 = vadd.f32 %v761, %v893
        %v895 = vpop.f32.mrb[0].mxu0
        %v896 = vpop.f32.mrb[0].mxu0
        %v897 = vadd.f32 %v761, %v896
        %v898 = vpop.f32.mrb[0].mxu0
        %899 = vmatprep.mubr.bf16.mxu0 0
        %900 = vmatmul.mubr.bf16.gmra.mrb[0].mxu0 %v739
        %v901 = vpop.f32.mrb[0].mxu0
        %v902 = vadd.f32 %v761, %v901
        %v903 = vpop.f32.mrb[0].mxu0
        %v904 = vpop.f32.mrb[0].mxu0
        %v905 = vadd.f32 %v761, %v904
        %v906 = vpop.f32.mrb[0].mxu0
        %907 = vdwg.mxu0
        %v908 = vmul.f32 %v846, 0.2
        %v909 = vmul.f32 %v849, 0.2
        %v910 = vmul.f32 %v854, 0.2
        %v911 = vmul.f32 %v857, 0.2
        %v912 = vmul.f32 %v862, 0.2
        %v913 = vmul.f32 %v865, 0.2
        %v914 = vmul.f32 %v870, 0.2
        %v915 = vmul.f32 %v873, 0.2
        %v916 = vmul.f32 %v878, 0.2
        %v917 = vmul.f32 %v881, 0.2
        %v918 = vmul.f32 %v886, 0.2
        %v919 = vmul.f32 %v889, 0.2
        %v920 = vmul.f32 %v894, 0.2
        %v921 = vmul.f32 %v897, 0.2
        %v922 = vmul.f32 %v902, 0.2
        %v923 = vmul.f32 %v905, 0.2
        %v924 = vmax.f32 %v846, %v908
        %v925 = vmax.f32 %v849, %v909
        %v926 = vmax.f32 %v854, %v910
        %v927 = vmax.f32 %v857, %v911
        %v928 = vmax.f32 %v862, %v912
        %v929 = vmax.f32 %v865, %v913
        %v930 = vmax.f32 %v870, %v914
        %v931 = vmax.f32 %v873, %v915
        %v932 = vmax.f32 %v878, %v916
        %v933 = vmax.f32 %v881, %v917
        %v934 = vmax.f32 %v886, %v918
        %v935 = vmax.f32 %v889, %v919
        %v936 = vmax.f32 %v894, %v920
        %v937 = vmax.f32 %v897, %v921
        %v938 = vmax.f32 %v902, %v922
        %v939 = vmax.f32 %v905, %v923
        %v940 = vpack.c.bf16 %v925, %v924
        %v941 = vpack.c.bf16 %v927, %v926
        %v942 = vpack.c.bf16 %v929, %v928
        %v943 = vpack.c.bf16 %v931, %v930
        %v944 = vpack.c.bf16 %v933, %v932
        %v945 = vpack.c.bf16 %v935, %v934
        %v946 = vpack.c.bf16 %v937, %v936
        %v947 = vpack.c.bf16 %v939, %v938
        %v948 = vld [vmem:[%s5] sm:$0xf]
        %v949 = vld [vmem:[%s5 + $0x4] sm:$0xf]
        %v950 = vld [vmem:[%s5 + $0x8] sm:$0xf]
        %v951 = vld [vmem:[%s5 + $0xc] sm:$0xf]
        %v952 = vld [vmem:[%s5 + $0x10] sm:$0xf]
        %v953 = vld [vmem:[%s5 + $0x14] sm:$0xf]
        %v954 = vld [vmem:[%s5 + $0x18] sm:$0xf]
        %v955 = vld [vmem:[%s5 + $0x1c] sm:$0xf]
        %v956 = vld [vmem:[%s6] sm:$0x1]
        %v958 = vlaneseq
        %v959 = vshrl.u32 %v958, 7
        %v960 = vsub.s32 0, %v959
        %v961 = vrot.slane %v956, %v960
        %v971 = vunpack.c.l.b16 %v948
        %v972 = vunpack.c.l.b16 %v949
        %v973 = vunpack.c.l.b16 %v950
        %v974 = vunpack.c.l.b16 %v951
        %v975 = vunpack.c.l.b16 %v952
        %v976 = vunpack.c.l.b16 %v953
        %v977 = vunpack.c.l.b16 %v954
        %v978 = vunpack.c.l.b16 %v955
        %v979 = vpack.c.b16 %v972, %v971
        %v980 = vpack.c.b16 %v974, %v973
        %v981 = vpack.c.b16 %v976, %v975
        %v982 = vpack.c.b16 %v978, %v977
        %vm987 = vcmask 523264
        %v989 = vsel %vm987, %v940, 0
        %v992 = vsel %vm987, %v941, 0
        %v995 = vsel %vm987, %v942, 0
        %v998 = vsel %vm987, %v943, 0
        %v1001 = vsel %vm987, %v944, 0
        %v1004 = vsel %vm987, %v945, 0
        %v1007 = vsel %vm987, %v946, 0
        %v1010 = vsel %vm987, %v947, 0
        %1012 = vmatprep.subr.bf16.mxu0 0
        %1013 = vmatpush1.bf16.msra.mxu0 %v979
        %1014 = vmatprep.subr.bf16.mxu0 0
        %1015 = vmatpush1.bf16.msra.mxu0 %v980
        %1016 = vmatprep.subr.bf16.mxu0 0
        %1017 = vmatpush1.bf16.msra.mxu0 %v981
        %1018 = vmatprep.subr.bf16.mxu0 0
        %1019 = vmatpush1.bf16.msra.mxu0 %v982
        %1020 = vmatprep.subr.bf16.mxu0 0
        %1021 = vmatpush1.bf16.msra.mxu0 0
        %1022 = vmatprep.subr.bf16.mxu0 0
        %1023 = vmatpush1.bf16.msra.mxu0 0
        %1024 = vmatprep.subr.bf16.mxu0 0
        %1025 = vmatpush1.bf16.msra.mxu0 0
        %1026 = vmatprep.subr.bf16.mxu0 0
        %1027 = vmatpush1.bf16.msra.mxu0 0
        %1028 = vmatprep.subr.bf16.mxu0 0
        %1029 = vmatpush1.bf16.msra.mxu0 0
        %1030 = vmatprep.subr.bf16.mxu0 0
        %1031 = vmatpush1.bf16.msra.mxu0 0
        %1032 = vmatprep.subr.bf16.mxu0 0
        %1033 = vmatpush1.bf16.msra.mxu0 0
        %1034 = vmatprep.subr.bf16.mxu0 0
        %1035 = vmatpush1.bf16.msra.mxu0 0
        %1036 = vmatprep.subr.bf16.mxu0 0
        %1037 = vmatpush1.bf16.msra.mxu0 0
        %1038 = vmatprep.subr.bf16.mxu0 0
        %1039 = vmatpush1.bf16.msra.mxu0 0
        %1040 = vmatprep.subr.bf16.mxu0 0
        %1041 = vmatpush1.bf16.msra.mxu0 0
        %1042 = vmatprep.subr.bf16.mxu0 0
        %1043 = vmatpush1.bf16.msra.mxu0 0
        %1044 = vmatprep.mubr.bf16.mxu0 0
        %1045 = vmatmul.mubr.bf16.gmra.mrb[0].mxu0 %v989
        %v1046 = vpop.f32.mrb[0].mxu0
        %v1047 = vadd.f32 %v961, %v1046
        %v1048 = vpop.f32.mrb[0].mxu0
        %v1049 = vpop.f32.mrb[0].mxu0
        %v1050 = vadd.f32 %v961, %v1049
        %v1051 = vpop.f32.mrb[0].mxu0
        %1052 = vmatprep.mubr.bf16.mxu0 0
        %1053 = vmatmul.mubr.bf16.gmra.mrb[0].mxu0 %v992
        %v1054 = vpop.f32.mrb[0].mxu0
        %v1055 = vadd.f32 %v961, %v1054
        %v1056 = vpop.f32.mrb[0].mxu0
        %v1057 = vpop.f32.mrb[0].mxu0
        %v1058 = vadd.f32 %v961, %v1057
        %v1059 = vpop.f32.mrb[0].mxu0
        %1060 = vmatprep.mubr.bf16.mxu0 0
        %1061 = vmatmul.mubr.bf16.gmra.mrb[0].mxu0 %v995
        %v1062 = vpop.f32.mrb[0].mxu0
        %v1063 = vadd.f32 %v961, %v1062
        %v1064 = vpop.f32.mrb[0].mxu0
        %v1065 = vpop.f32.mrb[0].mxu0
        %v1066 = vadd.f32 %v961, %v1065
        %v1067 = vpop.f32.mrb[0].mxu0
        %1068 = vmatprep.mubr.bf16.mxu0 0
        %1069 = vmatmul.mubr.bf16.gmra.mrb[0].mxu0 %v998
        %v1070 = vpop.f32.mrb[0].mxu0
        %v1071 = vadd.f32 %v961, %v1070
        %v1072 = vpop.f32.mrb[0].mxu0
        %v1073 = vpop.f32.mrb[0].mxu0
        %v1074 = vadd.f32 %v961, %v1073
        %v1075 = vpop.f32.mrb[0].mxu0
        %1076 = vmatprep.mubr.bf16.mxu0 0
        %1077 = vmatmul.mubr.bf16.gmra.mrb[0].mxu0 %v1001
        %v1078 = vpop.f32.mrb[0].mxu0
        %v1079 = vadd.f32 %v961, %v1078
        %v1080 = vpop.f32.mrb[0].mxu0
        %v1081 = vpop.f32.mrb[0].mxu0
        %v1082 = vadd.f32 %v961, %v1081
        %v1083 = vpop.f32.mrb[0].mxu0
        %1084 = vmatprep.mubr.bf16.mxu0 0
        %1085 = vmatmul.mubr.bf16.gmra.mrb[0].mxu0 %v1004
        %v1086 = vpop.f32.mrb[0].mxu0
        %v1087 = vadd.f32 %v961, %v1086
        %v1088 = vpop.f32.mrb[0].mxu0
        %v1089 = vpop.f32.mrb[0].mxu0
        %v1090 = vadd.f32 %v961, %v1089
        %v1091 = vpop.f32.mrb[0].mxu0
        %1092 = vmatprep.mubr.bf16.mxu0 0
        %1093 = vmatmul.mubr.bf16.gmra.mrb[0].mxu0 %v1007
        %v1094 = vpop.f32.mrb[0].mxu0
        %v1095 = vadd.f32 %v961, %v1094
        %v1096 = vpop.f32.mrb[0].mxu0
        %v1097 = vpop.f32.mrb[0].mxu0
        %v1098 = vadd.f32 %v961, %v1097
        %v1099 = vpop.f32.mrb[0].mxu0
        %1100 = vmatprep.mubr.bf16.mxu0 0
        %1101 = vmatmul.mubr.bf16.gmra.mrb[0].mxu0 %v1010
        %v1102 = vpop.f32.mrb[0].mxu0
        %v1103 = vadd.f32 %v961, %v1102
        %v1104 = vpop.f32.mrb[0].mxu0
        %v1105 = vpop.f32.mrb[0].mxu0
        %v1106 = vadd.f32 %v961, %v1105
        %v1107 = vpop.f32.mrb[0].mxu0
        %1108 = vdwg.mxu0
        %v1109 = vmul.f32 %v1047, 0.2
        %v1110 = vmul.f32 %v1050, 0.2
        %v1111 = vmul.f32 %v1055, 0.2
        %v1112 = vmul.f32 %v1058, 0.2
        %v1113 = vmul.f32 %v1063, 0.2
        %v1114 = vmul.f32 %v1066, 0.2
        %v1115 = vmul.f32 %v1071, 0.2
        %v1116 = vmul.f32 %v1074, 0.2
        %v1117 = vmul.f32 %v1079, 0.2
        %v1118 = vmul.f32 %v1082, 0.2
        %v1119 = vmul.f32 %v1087, 0.2
        %v1120 = vmul.f32 %v1090, 0.2
        %v1121 = vmul.f32 %v1095, 0.2
        %v1122 = vmul.f32 %v1098, 0.2
        %v1123 = vmul.f32 %v1103, 0.2
        %v1124 = vmul.f32 %v1106, 0.2
        %v1125 = vmax.f32 %v1047, %v1109
        %v1126 = vmax.f32 %v1050, %v1110
        %v1127 = vmax.f32 %v1055, %v1111
        %v1128 = vmax.f32 %v1058, %v1112
        %v1129 = vmax.f32 %v1063, %v1113
        %v1130 = vmax.f32 %v1066, %v1114
        %v1131 = vmax.f32 %v1071, %v1115
        %v1132 = vmax.f32 %v1074, %v1116
        %v1133 = vmax.f32 %v1079, %v1117
        %v1134 = vmax.f32 %v1082, %v1118
        %v1135 = vmax.f32 %v1087, %v1119
        %v1136 = vmax.f32 %v1090, %v1120
        %v1137 = vmax.f32 %v1095, %v1121
        %v1138 = vmax.f32 %v1098, %v1122
        %v1139 = vmax.f32 %v1103, %v1123
        %v1140 = vmax.f32 %v1106, %v1124
        %v1141 = vpack.c.bf16 %v1126, %v1125
        %v1142 = vpack.c.bf16 %v1128, %v1127
        %v1143 = vpack.c.bf16 %v1130, %v1129
        %v1144 = vpack.c.bf16 %v1132, %v1131
        %v1145 = vpack.c.bf16 %v1134, %v1133
        %v1146 = vpack.c.bf16 %v1136, %v1135
        %v1147 = vpack.c.bf16 %v1138, %v1137
        %v1148 = vpack.c.bf16 %v1140, %v1139
        %v1149 = vld [vmem:[%s7] sm:$0xf]
        %v1150 = vld [vmem:[%s7 + $0x4] sm:$0xf]
        %v1151 = vld [vmem:[%s7 + $0x8] sm:$0xf]
        %v1152 = vld [vmem:[%s7 + $0xc] sm:$0xf]
        %v1153 = vld [vmem:[#allocation2] sm:$0x1]
        %v1155 = vlaneseq
        %v1156 = vshrl.u32 %v1155, 7
        %v1157 = vsub.s32 0, %v1156
        %v1158 = vrot.slane %v1153, %v1157
        %v1164 = vunpack.c.l.b16 %v1149
        %v1165 = vunpack.c.l.b16 %v1150
        %v1166 = vunpack.c.l.b16 %v1151
        %v1167 = vunpack.c.l.b16 %v1152
        %v1168 = vpack.c.b16 %v1165, %v1164
        %v1169 = vpack.c.b16 %v1167, %v1166
        %vm1172 = vcmask 261120
        %v1174 = vsel %vm1172, %v1141, 0
        %v1177 = vsel %vm1172, %v1142, 0
        %v1180 = vsel %vm1172, %v1143, 0
        %v1183 = vsel %vm1172, %v1144, 0
        %v1186 = vsel %vm1172, %v1145, 0
        %v1189 = vsel %vm1172, %v1146, 0
        %v1192 = vsel %vm1172, %v1147, 0
        %v1195 = vsel %vm1172, %v1148, 0
        %1197 = vmatprep.subr.bf16.mxu0 0
        %1198 = vmatpush1.bf16.msra.mxu0 %v1168
        %1199 = vmatprep.subr.bf16.mxu0 0
        %1200 = vmatpush1.bf16.msra.mxu0 %v1169
        %1201 = vmatprep.subr.bf16.mxu0 0
        %1202 = vmatpush1.bf16.msra.mxu0 0
        %1203 = vmatprep.subr.bf16.mxu0 0
        %1204 = vmatpush1.bf16.msra.mxu0 0
        %1205 = vmatprep.subr.bf16.mxu0 0
        %1206 = vmatpush1.bf16.msra.mxu0 0
        %1207 = vmatprep.subr.bf16.mxu0 0
        %1208 = vmatpush1.bf16.msra.mxu0 0
        %1209 = vmatprep.subr.bf16.mxu0 0
        %1210 = vmatpush1.bf16.msra.mxu0 0
        %1211 = vmatprep.subr.bf16.mxu0 0
        %1212 = vmatpush1.bf16.msra.mxu0 0
        %1213 = vmatprep.subr.bf16.mxu0 0
        %1214 = vmatpush1.bf16.msra.mxu0 0
        %1215 = vmatprep.subr.bf16.mxu0 0
        %1216 = vmatpush1.bf16.msra.mxu0 0
        %1217 = vmatprep.subr.bf16.mxu0 0
        %1218 = vmatpush1.bf16.msra.mxu0 0
        %1219 = vmatprep.subr.bf16.mxu0 0
        %1220 = vmatpush1.bf16.msra.mxu0 0
        %1221 = vmatprep.subr.bf16.mxu0 0
        %1222 = vmatpush1.bf16.msra.mxu0 0
        %1223 = vmatprep.subr.bf16.mxu0 0
        %1224 = vmatpush1.bf16.msra.mxu0 0
        %1225 = vmatprep.subr.bf16.mxu0 0
        %1226 = vmatpush1.bf16.msra.mxu0 0
        %1227 = vmatprep.subr.bf16.mxu0 0
        %1228 = vmatpush1.bf16.msra.mxu0 0
        %1229 = vmatprep.mubr.bf16.mxu0 0
        %1230 = vmatmul.mubr.bf16.gmra.mrb[0].mxu0 %v1174
        %v1231 = vpop.f32.mrb[0].mxu0
        %v1232 = vadd.f32 %v1158, %v1231
        %v1233 = vpop.f32.mrb[0].mxu0
        %v1234 = vpop.f32.mrb[0].mxu0
        %v1235 = vadd.f32 %v1158, %v1234
        %v1236 = vpop.f32.mrb[0].mxu0
        %1237 = vmatprep.mubr.bf16.mxu0 0
        %1238 = vmatmul.mubr.bf16.gmra.mrb[0].mxu0 %v1177
        %v1239 = vpop.f32.mrb[0].mxu0
        %v1240 = vadd.f32 %v1158, %v1239
        %v1241 = vpop.f32.mrb[0].mxu0
        %v1242 = vpop.f32.mrb[0].mxu0
        %v1243 = vadd.f32 %v1158, %v1242
        %v1244 = vpop.f32.mrb[0].mxu0
        %1245 = vmatprep.mubr.bf16.mxu0 0
        %1246 = vmatmul.mubr.bf16.gmra.mrb[0].mxu0 %v1180
        %v1247 = vpop.f32.mrb[0].mxu0
        %v1248 = vadd.f32 %v1158, %v1247
        %v1249 = vpop.f32.mrb[0].mxu0
        %v1250 = vpop.f32.mrb[0].mxu0
        %v1251 = vadd.f32 %v1158, %v1250
        %v1252 = vpop.f32.mrb[0].mxu0
        %1253 = vmatprep.mubr.bf16.mxu0 0
        %1254 = vmatmul.mubr.bf16.gmra.mrb[0].mxu0 %v1183
        %v1255 = vpop.f32.mrb[0].mxu0
        %v1256 = vadd.f32 %v1158, %v1255
        %v1257 = vpop.f32.mrb[0].mxu0
        %v1258 = vpop.f32.mrb[0].mxu0
        %v1259 = vadd.f32 %v1158, %v1258
        %v1260 = vpop.f32.mrb[0].mxu0
        %1261 = vmatprep.mubr.bf16.mxu0 0
        %1262 = vmatmul.mubr.bf16.gmra.mrb[0].mxu0 %v1186
        %v1263 = vpop.f32.mrb[0].mxu0
        %v1264 = vadd.f32 %v1158, %v1263
        %v1265 = vpop.f32.mrb[0].mxu0
        %v1266 = vpop.f32.mrb[0].mxu0
        %v1267 = vadd.f32 %v1158, %v1266
        %v1268 = vpop.f32.mrb[0].mxu0
        %1269 = vmatprep.mubr.bf16.mxu0 0
        %1270 = vmatmul.mubr.bf16.gmra.mrb[0].mxu0 %v1189
        %v1271 = vpop.f32.mrb[0].mxu0
        %v1272 = vadd.f32 %v1158, %v1271
        %v1273 = vpop.f32.mrb[0].mxu0
        %v1274 = vpop.f32.mrb[0].mxu0
        %v1275 = vadd.f32 %v1158, %v1274
        %v1276 = vpop.f32.mrb[0].mxu0
        %1277 = vmatprep.mubr.bf16.mxu0 0
        %1278 = vmatmul.mubr.bf16.gmra.mrb[0].mxu0 %v1192
        %v1279 = vpop.f32.mrb[0].mxu0
        %v1280 = vadd.f32 %v1158, %v1279
        %v1281 = vpop.f32.mrb[0].mxu0
        %v1282 = vpop.f32.mrb[0].mxu0
        %v1283 = vadd.f32 %v1158, %v1282
        %v1284 = vpop.f32.mrb[0].mxu0
        %1285 = vmatprep.mubr.bf16.mxu0 0
        %1286 = vmatmul.mubr.bf16.gmra.mrb[0].mxu0 %v1195
        %v1287 = vpop.f32.mrb[0].mxu0
        %v1288 = vadd.f32 %v1158, %v1287
        %v1289 = vpop.f32.mrb[0].mxu0
        %v1290 = vpop.f32.mrb[0].mxu0
        %v1291 = vadd.f32 %v1158, %v1290
        %v1292 = vpop.f32.mrb[0].mxu0
        %1293 = vdwg.mxu0
        %v1294 = vsub.f32 0.0, %v1232
        %v1295 = vsub.f32 0.0, %v1235
        %v1296 = vsub.f32 0.0, %v1240
        %v1297 = vsub.f32 0.0, %v1243
        %v1298 = vsub.f32 0.0, %v1248
        %v1299 = vsub.f32 0.0, %v1251
        %v1300 = vsub.f32 0.0, %v1256
        %v1301 = vsub.f32 0.0, %v1259
        %v1302 = vsub.f32 0.0, %v1264
        %v1303 = vsub.f32 0.0, %v1267
        %v1304 = vsub.f32 0.0, %v1272
        %v1305 = vsub.f32 0.0, %v1275
        %v1306 = vsub.f32 0.0, %v1280
        %v1307 = vsub.f32 0.0, %v1283
        %v1308 = vsub.f32 0.0, %v1288
        %v1309 = vsub.f32 0.0, %v1291
        %v1310 = vmul.f32 %v1294, 1.442695
        %v1311 = vpow.pop %v1310
        %v1312 = vmul.f32 %v1295, 1.442695
        %v1313 = vpow.pop %v1312
        %v1314 = vmul.f32 %v1296, 1.442695
        %v1315 = vpow.pop %v1314
        %v1316 = vmul.f32 %v1297, 1.442695
        %v1317 = vpow.pop %v1316
        %v1318 = vmul.f32 %v1298, 1.442695
        %v1319 = vpow.pop %v1318
        %v1320 = vmul.f32 %v1299, 1.442695
        %v1321 = vpow.pop %v1320
        %v1322 = vmul.f32 %v1300, 1.442695
        %v1323 = vpow.pop %v1322
        %v1324 = vmul.f32 %v1301, 1.442695
        %v1325 = vpow.pop %v1324
        %v1326 = vmul.f32 %v1302, 1.442695
        %v1327 = vpow.pop %v1326
        %v1328 = vmul.f32 %v1303, 1.442695
        %v1329 = vpow.pop %v1328
        %v1330 = vmul.f32 %v1304, 1.442695
        %v1331 = vpow.pop %v1330
        %v1332 = vmul.f32 %v1305, 1.442695
        %v1333 = vpow.pop %v1332
        %v1334 = vmul.f32 %v1306, 1.442695
        %v1335 = vpow.pop %v1334
        %v1336 = vmul.f32 %v1307, 1.442695
        %v1337 = vpow.pop %v1336
        %v1338 = vmul.f32 %v1308, 1.442695
        %v1339 = vpow.pop %v1338
        %v1340 = vmul.f32 %v1309, 1.442695
        %v1341 = vpow.pop %v1340
        %v1342 = vadd.f32 %v1311, 1.0
        %v1343 = vadd.f32 %v1313, 1.0
        %v1344 = vadd.f32 %v1315, 1.0
        %v1345 = vadd.f32 %v1317, 1.0
        %v1346 = vadd.f32 %v1319, 1.0
        %v1347 = vadd.f32 %v1321, 1.0
        %v1348 = vadd.f32 %v1323, 1.0
        %v1349 = vadd.f32 %v1325, 1.0
        %v1350 = vadd.f32 %v1327, 1.0
        %v1351 = vadd.f32 %v1329, 1.0
        %v1352 = vadd.f32 %v1331, 1.0
        %v1353 = vadd.f32 %v1333, 1.0
        %v1354 = vadd.f32 %v1335, 1.0
        %v1355 = vadd.f32 %v1337, 1.0
        %v1356 = vadd.f32 %v1339, 1.0
        %v1357 = vadd.f32 %v1341, 1.0
        %v1358 = vrcp.pop %v1342
        %v1359 = vmul.f32 1.0, %v1358
        %v1360 = vrcp.pop %v1343
        %v1361 = vmul.f32 1.0, %v1360
        %v1362 = vrcp.pop %v1344
        %v1363 = vmul.f32 1.0, %v1362
        %v1364 = vrcp.pop %v1345
        %v1365 = vmul.f32 1.0, %v1364
        %v1366 = vrcp.pop %v1346
        %v1367 = vmul.f32 1.0, %v1366
        %v1368 = vrcp.pop %v1347
        %v1369 = vmul.f32 1.0, %v1368
        %v1370 = vrcp.pop %v1348
        %v1371 = vmul.f32 1.0, %v1370
        %v1372 = vrcp.pop %v1349
        %v1373 = vmul.f32 1.0, %v1372
        %v1374 = vrcp.pop %v1350
        %v1375 = vmul.f32 1.0, %v1374
        %v1376 = vrcp.pop %v1351
        %v1377 = vmul.f32 1.0, %v1376
        %v1378 = vrcp.pop %v1352
        %v1379 = vmul.f32 1.0, %v1378
        %v1380 = vrcp.pop %v1353
        %v1381 = vmul.f32 1.0, %v1380
        %v1382 = vrcp.pop %v1354
        %v1383 = vmul.f32 1.0, %v1382
        %v1384 = vrcp.pop %v1355
        %v1385 = vmul.f32 1.0, %v1384
        %v1386 = vrcp.pop %v1356
        %v1387 = vmul.f32 1.0, %v1386
        %v1388 = vrcp.pop %v1357
        %v1389 = vmul.f32 1.0, %v1388
        %vm1390 = vcmask 7168
        %1391 = vst.msk [vmem:[%s369] sm:$0xff] %vm1390, %v1359
        %1392 = vst.msk [vmem:[%s369 + $0x8] sm:$0xff] %vm1390, %v1361
        %1393 = vst.msk [vmem:[%s369 + $0x10] sm:$0xff] %vm1390, %v1363
        %1394 = vst.msk [vmem:[%s369 + $0x18] sm:$0xff] %vm1390, %v1365
        %1395 = vst.msk [vmem:[%s369 + $0x20] sm:$0xff] %vm1390, %v1367
        %1396 = vst.msk [vmem:[%s369 + $0x28] sm:$0xff] %vm1390, %v1369
        %1397 = vst.msk [vmem:[%s369 + $0x30] sm:$0xff] %vm1390, %v1371
        %1398 = vst.msk [vmem:[%s369 + $0x38] sm:$0xff] %vm1390, %v1373
        %1399 = vst.msk [vmem:[%s369 + $0x40] sm:$0xff] %vm1390, %v1375
        %1400 = vst.msk [vmem:[%s369 + $0x48] sm:$0xff] %vm1390, %v1377
        %1401 = vst.msk [vmem:[%s369 + $0x50] sm:$0xff] %vm1390, %v1379
        %1402 = vst.msk [vmem:[%s369 + $0x58] sm:$0xff] %vm1390, %v1381
        %1403 = vst.msk [vmem:[%s369 + $0x60] sm:$0xff] %vm1390, %v1383
        %1404 = vst.msk [vmem:[%s369 + $0x68] sm:$0xff] %vm1390, %v1385
        %1405 = vst.msk [vmem:[%s369 + $0x70] sm:$0xff] %vm1390, %v1387
        %1406 = vst.msk [vmem:[%s369 + $0x78] sm:$0xff] %vm1390, %v1389
        %s1407 = smul.u32 16, %s26
        %p1408 = scmp.lt.s32.totalorder %s1407, 31
        %s1409 = scalar_select %p1408, %s1407, 31
        %s1410 = smul.addr %s1409, 8
        %s1411 = scalar_lea.vmem %s9, %s1410
        // Predicated region
        $region65: #{tpu_custom_call.1} parent=55 // pred_check
          %p1412 = pneg %p238
        $region66: #{tpu_custom_call.1} parent=55 // pred_check_branch
          %1414 = sbr.rel (%p1412) target = $region68
        $region67: #{tpu_custom_call.1} parent=55 // pred_region
          %s1415 = smul.u32 16, %s26
        $region68: #{tpu_custom_call.1} parent=55 // pred_fallthru
          _
      $region56: #{tpu_custom_call.1} parent=5 // pred_fallthru
        _
      %p1416 = scmp.le.s32.totalorder 2, %s21
      // Predicated region
      $region69: #{tpu_custom_call.1} parent=5 // pred_check
        %p1417 = pneg %p1416
      $region70: #{tpu_custom_call.1} parent=5 // pred_check_branch
        %1419 = sbr.rel (%p1417) target = $region72
      $region71: #{tpu_custom_call.1} parent=5 // pred_region
        %s1420 = ssub.s32 %s21, 2
        // Predicated region
        $region73: #{tpu_custom_call.1} parent=71 // pred_check
          %p1421 = pneg %p244
        $region74: #{tpu_custom_call.1} parent=71 // pred_check_branch
          %1423 = sbr.rel (%p1421) target = $region76
        $region75: #{tpu_custom_call.1} parent=71 // pred_region
          %s1424 = smul.u32 16, %s27
          %p1425 = scmp.lt.s32.totalorder %s1424, 31
          %s1426 = scalar_select %p1425, %s1424, 31
          %s1427 = smul.addr %s1426, 8
          %s1428 = scalar_lea.vmem %s9, %s1427
        $region76: #{tpu_custom_call.1} parent=71 // pred_fallthru
          _
      $region72: #{tpu_custom_call.1} parent=5 // pred_fallthru
        _
    $region6: #{tpu_custom_call.1} parent=1 // loop_footer
      %s25 = sadd.s32 1, %s21
    $region7: #{tpu_custom_call.1} parent=1 // loop_footer_branch
      %20 = sbr.rel target = $region3
    $region8: #{tpu_custom_call.1} parent=1 // loop_exit
      _
    %1429 = vsyncpa [#allocation4], 1
    %s1430 = scalar_lea.sflag [#allocation4], 1
    %1431 = vsyncpa %s1430, 1
    %1432 = vsyncpa [#allocation6], 1

</llo_original>
